<compile_context>
chip_gen: v7x
topology: tpu7x:2x2x1
jax: 0.10.0
libtpu: 0.0.40
codegen_flags: <defaults>
</compile_context>

<pallas_src>
import jax
import jax.numpy as jnp
from jax.experimental import pallas as pl
from jax.experimental.pallas import tpu as pltpu

# Per-step live-tile byte target (input block + output block of one grid step).
# A few MiB saturates HBM; bigger tiles only collapse the grid, defeating the
# input/output DMA overlap and megacore sharding.
_TILE_BYTES = 2 * 1024 * 1024


def _collect_kernel(base_ref, out_ref):
    d = out_ref.shape[-1]
    if d == base_ref.shape[-1]:
        out_ref[...] = base_ref[...]          # plain tile copy
    else:
        out_ref[...] = base_ref[:, :d]        # static in-register column slice


def _sublane(itemsize):
    # Native sublane multiple: 8 rows for 4-byte, 16 for 2-byte, 32 for 1-byte.
    return max(8, (8 * 4) // max(int(itemsize), 1))


def collect_intervention(base, interchange_dim=None):
    """CollectIntervention.forward: return base[..., :interchange_dim]."""
    hidden = base.shape[-1]
    d = hidden if interchange_dim is None else int(interchange_dim)
    assert 0 < d <= hidden, "interchange_dim must be in (0, hidden]"

    # Full-width collect is the identity -> skip the kernel entirely.
    if d == hidden:
        return base

    lead = base.shape[:-1]
    rows = 1
    for s in lead:
        rows *= int(s)
    itemsize = jnp.dtype(base.dtype).itemsize

    # Only DMA the columns we actually need, rounded up to the 128-lane
    # boundary so the input block satisfies the (.,128) constraint; the
    # kernel slices [:d] in-register.
    in_cols = min(hidden, ((d + 127) // 128) * 128)
    if in_cols % 128 != 0:                # only possible when in_cols == hidden
        in_cols = hidden
    out_cols = d

    x2d = base.reshape(rows, hidden)

    # Row tile: a few MiB per step, aligned to the dtype's sublane multiple;
    # force >= 2 (prefer >= 8) grid steps so the auto-pipeline overlaps DMA
    # and v7x can shard the row axis across both TensorCores.
    sub = _sublane(itemsize)
    bytes_per_row = (in_cols + out_cols) * itemsize
    tr = max(sub, (_TILE_BYTES // max(bytes_per_row, 1)) // sub * sub)
    rows_padded = ((rows + sub - 1) // sub) * sub
    tr = min(tr, rows_padded)
    if rows >= 8 * sub:
        min_steps = 8
    elif rows >= 2 * sub:
        min_steps = 2
    else:
        min_steps = 1
    if min_steps > 1:
        tr = min(tr, max(sub, (rows // min_steps) // sub * sub))
    grid = (pl.cdiv(rows, tr),)

    # NOTE: for very small unaligned d an HBM->HBM strided-DMA variant
    # (memory_space=pl.ANY + make_async_copy) would avoid the lane-sparse
    # masked stores entirely; kept on the simple VMEM path here for clarity.
    out2d = pl.pallas_call(
        _collect_kernel,
        out_shape=jax.ShapeDtypeStruct((rows, out_cols), base.dtype),
        grid=grid,
        in_specs=[pl.BlockSpec((tr, in_cols), lambda i: (i, 0))],
        out_specs=pl.BlockSpec((tr, out_cols), lambda i: (i, 0)),
        compiler_params=pltpu.CompilerParams(
            dimension_semantics=("parallel",),   # rows independent: both TCs
        ),
        cost_estimate=pl.CostEstimate(
            flops=0,
            transcendentals=0,
            bytes_accessed=rows * bytes_per_row,
        ),
    )(x2d)

    # TODO(synk): subspaces / subspace_partition column-gather path of
    # _do_intervention_by_swap is not implemented (default forward passes None).
    return out2d.reshape(lead + (d,))


if __name__ == "__main__":
    key = jax.random.PRNGKey(0)

    # Small shapes consistent with the module: batch=2, seq=8, hidden=32.
    B, S, H = 2, 8, 32
    base = jax.random.normal(key, (B, S, H), dtype=jnp.float32)

    # Default pyvene config: interchange_dim == embed_dim (full collect -> identity).
    out_full = jax.block_until_ready(collect_intervention(base, H))
    assert out_full.shape == (B, S, H)
    assert jnp.array_equal(out_full, base[..., :H]), "full-width collect mismatch"

    # Partial, lane-unaligned collect (set_interchange_dim < embed_dim) -> kernel.
    d = 20
    out_part = jax.block_until_ready(collect_intervention(base, d))
    assert out_part.shape == (B, S, d)
    assert jnp.array_equal(out_part, base[..., :d]), "partial collect mismatch"

    # Wider hidden exercising the round_up(d,128)-column partial read, bf16.
    H2, d2 = 512, 200
    base2 = jax.random.normal(jax.random.PRNGKey(0), (B, S, H2), dtype=jnp.bfloat16)
    out2 = jax.block_until_ready(collect_intervention(base2, d2))
    assert out2.shape == (B, S, d2)
    assert jnp.array_equal(out2, base2[..., :d2]), "bf16 partial collect mismatch"

    print("KERNEL_OK")
</pallas_src>

<mosaic_0001>
module attributes {stable_mosaic.version = 11 : i64} {
  func.func @_collect_kernel(%arg0: i32, %arg1: memref<8x32xf32, #tpu.memory_space<vmem>>, %arg2: memref<8x20xf32, #tpu.memory_space<vmem>>) attributes {dimension_semantics = [#tpu.dimension_semantics<parallel>], iteration_bounds = array<i64: 2>, scalar_prefetch = 0 : i64, scratch_operands = 0 : i64, tpu.core_type = #tpu.core_type<tc>, window_params = [{transform_indices = @transform_0, window_bounds = array<i64: 8, 32>}, {transform_indices = @transform_1, window_bounds = array<i64: 8, 20>}]} {
    %c0 = arith.constant 0 : index
    %c0_0 = arith.constant 0 : index
    %0 = vector.load %arg1[%c0, %c0_0] : memref<8x32xf32, #tpu.memory_space<vmem>>, vector<8x20xf32>
    %c0_1 = arith.constant 0 : index
    %c0_2 = arith.constant 0 : index
    %1 = vector.load %arg2[%c0_1, %c0_2] : memref<8x20xf32, #tpu.memory_space<vmem>>, vector<8x20xf32>
    tpu.vector_store %arg2[%c0_1, %c0_2], %0 {strides = array<i32>} : memref<8x20xf32, #tpu.memory_space<vmem>>, vector<8x20xf32>,
    return
  }
  func.func @transform_0(%arg0: i32) -> (i32, i32) {
    %c0_i32 = arith.constant 0 : i32
    %c0_i32_0 = arith.constant 0 : i32
    return %arg0, %c0_i32 : i32, i32
  }
  func.func @transform_1(%arg0: i32) -> (i32, i32) {
    %c0_i32 = arith.constant 0 : i32
    %c0_i32_0 = arith.constant 0 : i32
    return %arg0, %c0_i32 : i32, i32
  }
}

</mosaic_0001>

<llo_original>
// kernel: tpu_custom_call.1
$region0: #{tpu_custom_call.1}
  #allocation0 [shape = 'u32[]', space=smem, size = 0x4, offset = 0x4, fixed_abs, tag = 'smem constant byte address 0x4 - core index']
  #allocation1 [shape = 'u32[144,128]{1,0:T(1,128)}', space=vmem, size = 0x12000, scoped, tag = 'internal scratch']
  %s0 = inlined_call_operand.hbm [shape: f32[16,32], index: 0, kind: input, shape index: {}]
  %s1 = inlined_call_operand.hbm [shape: f32[16,20], index: 1, kind: output, shape index: {}]
  %s2 = sld [smem:[#allocation0]]
  $region41: #{tpu_custom_call.1} parent=0
    _
  %s4 = ssub.s32 1, %s2
  %s5 = scalar_select 0, %s4, %s2
  $region1: #{tpu_custom_call.1} parent=0
    #allocation2 [shape = 'u8[8192]{0}', space=vmem, size = 0x2000, scoped, tag = 'input window, operand 0']
    #allocation3 [shape = 's32[2]{0}', space=sflag, size = 0x8, scoped, tag = 'scoped memory for tpu_custom_call.1']
    #allocation4 [shape = 's32[2]{0}', space=sflag, size = 0x8, scoped, tag = 'scoped memory for tpu_custom_call.1']
    #allocation5 [shape = 'u8[8192]{0}', space=vmem, size = 0x2000, scoped, tag = 'output window, operand 0']
    %6 = vsyncpa [#allocation3], 0
    %s7 = scalar_lea.sflag [#allocation3], 1
    %8 = vsyncpa %s7, 0
    %9 = vsyncpa [#allocation4], 0
    %s10 = scalar_lea.sflag [#allocation4], 1
    %11 = vsyncpa %s10, 0
    loop: start=0, step=1, limit=4
    $region2: #{tpu_custom_call.1} parent=1 // loop_pre_header
      _
    $region3: #{tpu_custom_call.1} parent=1 // loop_header
      %s13 = sphi 0, %s17
      %p14 = scmp.ge.s32.totalorder %s13, 4
      %s23 = sphi 0, %s25
      %s26 = sphi 0, %s23
      %s27 = sphi 0, %s26
      %s43 = sphi 0, %s27
      %s49 = sphi 0, %s51
      %s52 = sphi 0, %s49
      %s53 = sphi 0, %s52
      %s69 = sphi 0, %s53
    $region4: #{tpu_custom_call.1} parent=1 // loop_header_branch
      %16 = sbr.rel (%p14) target = $region8
    $region5: #{tpu_custom_call.1} parent=1 // loop_body
      %s18 = ssub.s32 %s13, 1
      %s19 = ssub.s32 %s13, 2
      %s20 = sadd.s32 %s13, 1
      %s21 = ssub.s32 %s13, %s20
      %p22 = scmp.eq.s32.totalorder %s21, 0
      %s24 = sadd.s32 %s23, 1
      %s25 = scalar_select %p22, %s23, %s24
      %p28 = pneg %p22
      %p29 = scmp.eq.s32.totalorder %s13, 1
      %p30 = por %p28, %p29
      %p31 = scmp.ne.s32.totalorder %s23, %s26
      %p32 = scmp.eq.s32.totalorder %s13, 0
      %p33 = por %p31, %p32
      %p34 = scmp.ne.s32.totalorder %s23, %s26
      %p35 = scmp.eq.s32.totalorder %s18, 1
      %p36 = por %p34, %p35
      %p37 = scmp.ne.s32.totalorder %s26, %s27
      %p38 = scmp.eq.s32.totalorder %s18, 0
      %p39 = por %p37, %p38
      %p40 = scmp.ne.s32.totalorder %s26, %s27
      %p41 = scmp.eq.s32.totalorder %s19, 1
      %p42 = por %p40, %p41
      %p44 = scmp.ne.s32.totalorder %s27, %s43
      %p45 = scmp.eq.s32.totalorder %s19, 0
      %p46 = por %p44, %p45
      %s47 = ssub.s32 %s13, %s20
      %p48 = scmp.eq.s32.totalorder %s47, 0
      %s50 = sadd.s32 %s49, 1
      %s51 = scalar_select %p48, %s49, %s50
      %p54 = pneg %p48
      %p55 = scmp.eq.s32.totalorder %s13, 1
      %p56 = por %p54, %p55
      %p57 = scmp.ne.s32.totalorder %s49, %s52
      %p58 = scmp.eq.s32.totalorder %s13, 0
      %p59 = por %p57, %p58
      %p60 = scmp.ne.s32.totalorder %s49, %s52
      %p61 = scmp.eq.s32.totalorder %s18, 1
      %p62 = por %p60, %p61
      %p63 = scmp.ne.s32.totalorder %s52, %s53
      %p64 = scmp.eq.s32.totalorder %s18, 0
      %p65 = por %p63, %p64
      %p66 = scmp.ne.s32.totalorder %s52, %s53
      %p67 = scmp.eq.s32.totalorder %s19, 1
      %p68 = por %p66, %p67
      %p70 = scmp.ne.s32.totalorder %s53, %s69
      %p71 = scmp.eq.s32.totalorder %s19, 0
      %p72 = por %p70, %p71
      %p73 = scmp.le.s32.totalorder 1, %s13
      %p74 = scmp.lt.s32.totalorder %s13, 3
      %p75 = pnand %p73, %p74
      %p76 = pneg %p75
      // Predicated region
      $region9: #{tpu_custom_call.1} parent=5 // pred_check
        _
      $region10: #{tpu_custom_call.1} parent=5 // pred_check_branch
        %78 = sbr.rel (%p75) target = $region12
      $region11: #{tpu_custom_call.1} parent=5 // pred_region
        %s79 = ssub.s32 %s13, 1
      $region12: #{tpu_custom_call.1} parent=5 // pred_fallthru
        _
      %p80 = scmp.lt.s32.totalorder %s13, 2
      // Predicated region
      $region13: #{tpu_custom_call.1} parent=5 // pred_check
        %p81 = pneg %p80
      $region14: #{tpu_custom_call.1} parent=5 // pred_check_branch
        %83 = sbr.rel (%p81) target = $region16
      $region15: #{tpu_custom_call.1} parent=5 // pred_region
        // Predicated region
        $region17: #{tpu_custom_call.1} parent=15 // pred_check
          %p84 = pneg %p33
        $region18: #{tpu_custom_call.1} parent=15 // pred_check_branch
          %86 = sbr.rel (%p84) target = $region20
        $region19: #{tpu_custom_call.1} parent=15 // pred_region
          %s87 = sand.u32 %s23, 1
          %s88 = scalar_lea.sflag [#allocation3], %s87
          %s89 = sand.u32 %s23, 1
          %s90 = smul.addr %s89, 8
          %s91 = scalar_lea.vmem [#allocation2], %s90
          %s93 = ssub.s32 128, 128
          %94 = vsyncadd %s88, %s93
          %s95 = smul.addr %s13, 128
          %s96 = scalar_lea.hbm %s0, %s95
          %s98 = sshll.u32 %s91, 4
          %s99 = int_to_ptr.vmem [resolvable:$true] %s98
          %101 = dma.hbm_to_vmem [thread:$0]  %s96, 128, %s99, %s88
        $region20: #{tpu_custom_call.1} parent=15 // pred_fallthru
          _
      $region16: #{tpu_custom_call.1} parent=5 // pred_fallthru
        _
      %p102 = scmp.le.s32.totalorder 1, %s13
      %p103 = scmp.lt.s32.totalorder %s13, 3
      %p104 = pnand %p102, %p103
      %p105 = pneg %p104
      // Predicated region
      $region21: #{tpu_custom_call.1} parent=5 // pred_check
        _
      $region22: #{tpu_custom_call.1} parent=5 // pred_check_branch
        %107 = sbr.rel (%p104) target = $region24
      $region23: #{tpu_custom_call.1} parent=5 // pred_region
        %s108 = ssub.s32 %s13, 1
        %s109 = sand.u32 %s26, 1
        %s110 = scalar_lea.sflag [#allocation3], %s109
        %s111 = sand.u32 %s26, 1
        %s112 = smul.addr %s111, 8
        %s113 = scalar_lea.vmem [#allocation2], %s112
        // Predicated region
        $region25: #{tpu_custom_call.1} parent=23 // pred_check
          %p114 = pneg %p39
        $region26: #{tpu_custom_call.1} parent=23 // pred_check_branch
          %116 = sbr.rel (%p114) target = $region28
        $region27: #{tpu_custom_call.1} parent=23 // pred_region
          %117 = dma.done %s110, 128
        $region28: #{tpu_custom_call.1} parent=23 // pred_fallthru
          _
        %s118 = sand.u32 %s26, 1
        %s119 = scalar_lea.sflag [#allocation3], %s118
        %s120 = sand.u32 %s26, 1
        %s121 = smul.addr %s120, 8
        %s122 = scalar_lea.vmem [#allocation2], %s121
        %p123 = pneg %p39
        %p124 = pneg %p36
        %p125 = pneg %p65
        %p126 = pneg %p62
        %s127 = sand.u32 %s52, 1
        %s128 = scalar_lea.sflag [#allocation4], %s127
        %s129 = sand.u32 %s52, 1
        %s130 = smul.addr %s129, 8
        %s131 = scalar_lea.vmem [#allocation5], %s130
        %v132 = vld [vmem:[%s113] sm:$0xff]
        %vm133 = vcmask 162816
        %134 = vst.msk [vmem:[%s131] sm:$0xff] %vm133, %v132
        %s135 = sand.u32 %s52, 1
        %s136 = scalar_lea.sflag [#allocation4], %s135
        %s137 = sand.u32 %s52, 1
        %s138 = smul.addr %s137, 8
        %s139 = scalar_lea.vmem [#allocation5], %s138
        // Predicated region
        $region29: #{tpu_custom_call.1} parent=23 // pred_check
          %p140 = pneg %p62
        $region30: #{tpu_custom_call.1} parent=23 // pred_check_branch
          %142 = sbr.rel (%p140) target = $region32
        $region31: #{tpu_custom_call.1} parent=23 // pred_region
          %s144 = ssub.s32 128, 128
          %145 = vsyncadd %s136, %s144
          %s146 = smul.addr %s18, 128
          %s147 = scalar_lea.hbm %s1, %s146
          %s149 = sshll.u32 %s139, 4
          %s150 = int_to_ptr.vmem [resolvable:$true] %s149
          %152 = dma.vmem_to_hbm [thread:$0]  %s150, 128, %s147, %s136
        $region32: #{tpu_custom_call.1} parent=23 // pred_fallthru
          _
      $region24: #{tpu_custom_call.1} parent=5 // pred_fallthru
        _
      %p153 = scmp.le.s32.totalorder 2, %s13
      // Predicated region
      $region33: #{tpu_custom_call.1} parent=5 // pred_check
        %p154 = pneg %p153
      $region34: #{tpu_custom_call.1} parent=5 // pred_check_branch
        %156 = sbr.rel (%p154) target = $region36
      $region35: #{tpu_custom_call.1} parent=5 // pred_region
        %s157 = ssub.s32 %s13, 2
        // Predicated region
        $region37: #{tpu_custom_call.1} parent=35 // pred_check
          %p158 = pneg %p68
        $region38: #{tpu_custom_call.1} parent=35 // pred_check_branch
          %160 = sbr.rel (%p158) target = $region40
        $region39: #{tpu_custom_call.1} parent=35 // pred_region
          %s161 = sand.u32 %s53, 1
          %s162 = scalar_lea.sflag [#allocation4], %s161
          %s163 = sand.u32 %s53, 1
          %s164 = smul.addr %s163, 8
          %s165 = scalar_lea.vmem [#allocation5], %s164
          %166 = dma.done %s162, 128
        $region40: #{tpu_custom_call.1} parent=35 // pred_fallthru
          _
      $region36: #{tpu_custom_call.1} parent=5 // pred_fallthru
        _
    $region6: #{tpu_custom_call.1} parent=1 // loop_footer
      %s17 = sadd.s32 1, %s13
    $region7: #{tpu_custom_call.1} parent=1 // loop_footer_branch
      %12 = sbr.rel target = $region3
    $region8: #{tpu_custom_call.1} parent=1 // loop_exit
      _
    %167 = vsyncpa [#allocation3], 1
    %s168 = scalar_lea.sflag [#allocation3], 1
    %169 = vsyncpa %s168, 1
    %170 = vsyncpa [#allocation4], 1
    %s171 = scalar_lea.sflag [#allocation4], 1
    %172 = vsyncpa %s171, 1

</llo_original>
